<compile_context>
chip_gen: v7x
topology: tpu7x:2x2x1
jax: 0.10.0
libtpu: 0.0.40
codegen_flags: <defaults>
</compile_context>

<pallas_src>
import jax
import jax.numpy as jnp
from jax.experimental import pallas as pl
from jax.experimental.pallas import tpu as pltpu

GRAD_CLIP = 0.01


def _clip_kernel(g_ref, o_ref):
    g = g_ref[...]
    # Single fused select: NaN fails the <= comparison, so it is zeroed too.
    o_ref[...] = jnp.where(jnp.abs(g) <= GRAD_CLIP, g, jnp.zeros_like(g))


def _choose_layout(n, itemsize):
    """Pick (lanes, rows, block_rows) for a lane-dense streaming layout."""
    lanes = 128
    for cand in (1024, 512, 256, 128):
        if n % cand == 0:
            lanes = cand
            break
    rows = pl.cdiv(n, lanes)
    # ~1 MiB per block buffer; with double-buffered in + out that is ~4 MiB of
    # VMEM, well within default scoped limits on v5e (16 MiB) / v6e / v7x.
    target_rows = max(32, ((1 << 20) // (lanes * itemsize)) // 32 * 32)
    block_rows = rows if rows <= target_rows else target_rows
    return lanes, rows, block_rows


def _clip_grad(g):
    shape = g.shape
    n = int(g.size)
    if n == 0:
        return g
    itemsize = jnp.dtype(g.dtype).itemsize
    lanes, rows, block_rows = _choose_layout(n, itemsize)

    flat = g.reshape(-1)
    padded = rows * lanes
    if padded != n:  # only pad when n is not already lane-aligned
        flat = jnp.pad(flat, (0, padded - n))
    g2d = flat.reshape(rows, lanes)

    y2d = pl.pallas_call(
        _clip_kernel,
        out_shape=jax.ShapeDtypeStruct((rows, lanes), g.dtype),
        grid_spec=pltpu.PrefetchScalarGridSpec(
            num_scalar_prefetch=0,
            grid=(pl.cdiv(rows, block_rows),),
            in_specs=[pl.BlockSpec((block_rows, lanes), lambda i: (i, 0))],
            out_specs=pl.BlockSpec((block_rows, lanes), lambda i: (i, 0)),
        ),
        compiler_params=pltpu.CompilerParams(
            dimension_semantics=("parallel",),  # shards across v7x's 2 TCs
        ),
        cost_estimate=pl.CostEstimate(
            flops=0, transcendentals=0, bytes_accessed=2 * n * itemsize
        ),
    )(g2d)

    out_flat = y2d.reshape(-1)
    if padded != n:
        out_flat = out_flat[:n]
    return out_flat.reshape(shape)


@jax.custom_vjp
def gradient_clip(x):
    # Forward is the identity; returning x directly avoids a wasted HBM pass.
    return x


def _gradient_clip_fwd(x):
    return x, None


def _gradient_clip_bwd(_, g):
    return (_clip_grad(g),)


gradient_clip.defvjp(_gradient_clip_fwd, _gradient_clip_bwd)


if __name__ == "__main__":
    key = jax.random.PRNGKey(0)
    x = jax.random.normal(key, (2, 4, 16, 16), dtype=jnp.float32)  # NCHW

    # Forward: identity.
    y = gradient_clip(x)
    y = jax.block_until_ready(y)
    assert y.shape == x.shape and y.dtype == x.dtype
    assert bool(jnp.allclose(y, x))

    # Backward: cotangent = scale; include values beyond the clip and a NaN.
    scale = jax.random.uniform(jax.random.PRNGKey(1), x.shape,
                               minval=-0.05, maxval=0.05, dtype=jnp.float32)
    scale = scale.at[0, 0, 0, 0].set(jnp.nan)

    def loss(inp, s):
        return jnp.sum(gradient_clip(inp) * s)

    g = jax.grad(loss)(x, scale)
    g = jax.block_until_ready(g)

    # Reference backward semantics (two-step, as in the PyTorch module).
    g_ref = jnp.where(jnp.abs(scale) > GRAD_CLIP, 0.0, scale)
    g_ref = jnp.where(jnp.isnan(g_ref), 0.0, g_ref)
    assert bool(jnp.allclose(g, g_ref))

    # Also exercise the lane-padding fast path with a non-power-of-two size.
    odd = jax.random.normal(jax.random.PRNGKey(2), (5, 7, 13), jnp.float32) * 0.02
    odd_clipped = jax.block_until_ready(_clip_grad(odd))
    odd_ref = jnp.where(jnp.abs(odd) > GRAD_CLIP, 0.0, odd)
    odd_ref = jnp.where(jnp.isnan(odd_ref), 0.0, odd_ref)
    assert bool(jnp.allclose(odd_clipped, odd_ref))

    print("KERNEL_OK")
</pallas_src>

<mosaic_0001>
module attributes {stable_mosaic.version = 11 : i64} {
  func.func @_clip_kernel(%arg0: i32, %arg1: memref<2x1024xf32, #tpu.memory_space<vmem>>, %arg2: memref<2x1024xf32, #tpu.memory_space<vmem>>) attributes {dimension_semantics = [#tpu.dimension_semantics<parallel>], iteration_bounds = array<i64: 1>, scalar_prefetch = 0 : i64, scratch_operands = 0 : i64, tpu.core_type = #tpu.core_type<tc>, window_params = [{transform_indices = @transform_0, window_bounds = array<i64: 2, 1024>}, {transform_indices = @transform_1, window_bounds = array<i64: 2, 1024>}]} {
    %c0 = arith.constant 0 : index
    %c0_0 = arith.constant 0 : index
    %0 = vector.load %arg1[%c0, %c0_0] : memref<2x1024xf32, #tpu.memory_space<vmem>>, vector<2x1024xf32>
    %1 = math.absf %0 : vector<2x1024xf32>
    %cst = arith.constant 0.00999999977 : f32
    %2 = vector.broadcast %cst : f32 to vector<2x1024xf32>
    %3 = arith.cmpf ole, %1, %2 : vector<2x1024xf32>
    %cst_1 = arith.constant 0.000000e+00 : f32
    %4 = vector.broadcast %cst_1 : f32 to vector<2x1024xf32>
    %5 = arith.select %3, %0, %4 : vector<2x1024xi1>, vector<2x1024xf32>
    %c0_2 = arith.constant 0 : index
    %c0_3 = arith.constant 0 : index
    %6 = vector.load %arg2[%c0_2, %c0_3] : memref<2x1024xf32, #tpu.memory_space<vmem>>, vector<2x1024xf32>
    tpu.vector_store %arg2[%c0_2, %c0_3], %5 {strides = array<i32>} : memref<2x1024xf32, #tpu.memory_space<vmem>>, vector<2x1024xf32>,
    return
  }
  func.func @transform_0(%arg0: i32) -> (i32, i32) {
    %c0_i32 = arith.constant 0 : i32
    %c0_i32_0 = arith.constant 0 : i32
    return %arg0, %c0_i32 : i32, i32
  }
  func.func @transform_1(%arg0: i32) -> (i32, i32) {
    %c0_i32 = arith.constant 0 : i32
    %c0_i32_0 = arith.constant 0 : i32
    return %arg0, %c0_i32 : i32, i32
  }
}

</mosaic_0001>

<llo_original>
// kernel: tpu_custom_call.1
$region0: #{tpu_custom_call.1}
  #allocation0 [shape = 'u32[]', space=smem, size = 0x4, offset = 0x4, fixed_abs, tag = 'smem constant byte address 0x4 - core index']
  #allocation1 [shape = 'u32[144,128]{1,0:T(1,128)}', space=vmem, size = 0x12000, scoped, tag = 'internal scratch']
  %s0 = inlined_call_operand.hbm [shape: f32[2,1024], index: 0, kind: input, shape index: {}]
  %s1 = inlined_call_operand.hbm [shape: f32[2,1024], index: 1, kind: output, shape index: {}]
  %s2 = sld [smem:[#allocation0]]
  $region18: #{tpu_custom_call.1} parent=0
    _
  %s4 = ssub.s32 1, %s2
  %s5 = scalar_select 0, %s4, %s2
  $region1: #{tpu_custom_call.1} parent=0
    #allocation2 [shape = 'u8[8192]{0}', space=vmem, size = 0x2000, scoped, tag = 'input window, operand 0, single buffered']
    #allocation3 [shape = 's32[1]{0}', space=sflag, size = 0x4, scoped, tag = 'scoped memory for tpu_custom_call.1']
    #allocation4 [shape = 's32[1]{0}', space=sflag, size = 0x4, scoped, tag = 'scoped memory for tpu_custom_call.1']
    #allocation5 [shape = 'u8[8192]{0}', space=vmem, size = 0x2000, scoped, tag = 'output window, operand 0, single buffered']
    %6 = vsyncpa [#allocation3], 0
    %7 = vsyncpa [#allocation4], 0
    // Predicated region
    $region2: #{tpu_custom_call.1} parent=1 // pred_check
      _
    $region3: #{tpu_custom_call.1} parent=1 // pred_check_branch
      %9 = sbr.rel (0) target = $region5
    $region4: #{tpu_custom_call.1} parent=1 // pred_region
      %s11 = ssub.s32 256, 256
      %12 = vsyncadd [#allocation3], %s11
      %s14 = sshll.u32 [#allocation2], 4
      %s15 = int_to_ptr.vmem [resolvable:$true] %s14
      %17 = dma.hbm_to_vmem [thread:$0]  %s0, 256, %s15, [#allocation3]
    $region5: #{tpu_custom_call.1} parent=1 // pred_fallthru
      _
    // Predicated region
    $region6: #{tpu_custom_call.1} parent=1 // pred_check
      _
    $region7: #{tpu_custom_call.1} parent=1 // pred_check_branch
      %19 = sbr.rel (0) target = $region9
    $region8: #{tpu_custom_call.1} parent=1 // pred_region
      %20 = dma.done [#allocation3], 256
    $region9: #{tpu_custom_call.1} parent=1 // pred_fallthru
      _
    %v21 = vld [vmem:[#allocation2] sm:$0xff]
    %v22 = vld [vmem:[#allocation2 + $0x8] sm:$0xff]
    %v23 = vand.u32 2147483647, %v21
    %v24 = vand.u32 2147483647, %v22
    %vm25 = vcmp.le.f32.partialorder %v23, 0.01
    %vm26 = vcmp.le.f32.partialorder %v24, 0.01
    %v27 = vsel %vm25, %v21, 0.0
    %v28 = vsel %vm26, %v22, 0.0
    %29 = vst [vmem:[#allocation5] sm:$0xff] %v27
    %30 = vst [vmem:[#allocation5 + $0x8] sm:$0xff] %v28
    // Predicated region
    $region10: #{tpu_custom_call.1} parent=1 // pred_check
      _
    $region11: #{tpu_custom_call.1} parent=1 // pred_check_branch
      %32 = sbr.rel (0) target = $region13
    $region12: #{tpu_custom_call.1} parent=1 // pred_region
      %s34 = ssub.s32 256, 256
      %35 = vsyncadd [#allocation4], %s34
      %s37 = sshll.u32 [#allocation5], 4
      %s38 = int_to_ptr.vmem [resolvable:$true] %s37
      %40 = dma.vmem_to_hbm [thread:$0]  %s38, 256, %s1, [#allocation4]
    $region13: #{tpu_custom_call.1} parent=1 // pred_fallthru
      _
    // Predicated region
    $region14: #{tpu_custom_call.1} parent=1 // pred_check
      _
    $region15: #{tpu_custom_call.1} parent=1 // pred_check_branch
      %42 = sbr.rel (0) target = $region17
    $region16: #{tpu_custom_call.1} parent=1 // pred_region
      %43 = dma.done [#allocation4], 256
    $region17: #{tpu_custom_call.1} parent=1 // pred_fallthru
      _
    %44 = vsyncpa [#allocation3], 1
    %45 = vsyncpa [#allocation4], 1

</llo_original>
